<compile_context>
chip_gen: v6e
topology: v6e:2x2x1
jax: 0.10.0
libtpu: 0.0.40
codegen_flags: <defaults>
</compile_context>

<pallas_src>
import jax
import jax.numpy as jnp
from jax.experimental import pallas as pl
from jax.experimental.pallas import tpu as pltpu


def _fused_residual_matmul_kernel(xcol_ref, w_ref, o_ref):
    """One fused conv-as-matmul step.

    xcol_ref: (block_m, K_pad)  bf16 im2col rows (+ ones column for bias)
    w_ref   : (K_pad, C_pad)    bf16 fused 3x3(+skip) weights, bias in row K
    o_ref   : (block_m, C_pad)  bf16 output rows
    """
    acc = jnp.dot(xcol_ref[...], w_ref[...],
                  preferred_element_type=jnp.float32)     # MXU, f32 accumulate
    o_ref[...] = acc.astype(o_ref.dtype)                  # single bf16 store


def _round_up(x, m):
    return (x + m - 1) // m * m


def residual_forward(x_nchw, w_skip, b_skip, w_body, b_body):
    """x_nchw: (N, C, H, W) float32 -> (N, C, H, W) float32.

    w_skip: (C_in, C_out) 1x1 conv matrix; w_body: (3, 3, C_in, C_out) HWIO.
    """
    N, C, H, W = x_nchw.shape

    # ---- fold skip (1x1) into the center tap of the 3x3 body conv (in f32) --
    w_fused = w_body.at[1, 1].add(w_skip)                 # (3,3,C,C) HWIO
    b_fused = (b_skip + b_body).astype(jnp.float32)       # (C,)

    # ---- layout glue: NHWC, cast to bf16 BEFORE im2col, spatial pad ---------
    x_nhwc = jnp.transpose(x_nchw, (0, 2, 3, 1)).astype(jnp.bfloat16)  # (N,H,W,C)
    x_pad = jnp.pad(x_nhwc, ((0, 0), (1, 1), (1, 1), (0, 0)))
    patches = [x_pad[:, dh:dh + H, dw:dw + W, :]
               for dh in range(3) for dw in range(3)]
    x_col = jnp.concatenate(patches, axis=-1).reshape(N * H * W, 9 * C)

    K = 9 * C                                             # 324
    K_pad = _round_up(K + 1, 128)                         # 384 (lane aligned, +bias row)
    C_pad = _round_up(C, 128)                             # 128 (lane-dense out)
    M = N * H * W

    # ---- tile selection: VMEM-capped block_m, even grid for v7x megacore ----
    MAX_BLOCK_M = 2048
    block_m = min(MAX_BLOCK_M, max(8, _round_up(pl.cdiv(M, 2), 8)))
    grid_m = pl.cdiv(M, block_m)
    if grid_m > 1 and grid_m % 2 == 1:
        grid_m += 1                                       # keep both v7x cores busy
    M_pad = grid_m * block_m

    # ---- fold bias into a spare K row; pad rows/cols to tile multiples ------
    ones_col = jnp.ones((M, 1), dtype=jnp.bfloat16)
    x_col = jnp.concatenate([x_col, ones_col], axis=-1)   # (M, K+1)
    x_col = jnp.pad(x_col, ((0, M_pad - M), (0, K_pad - (K + 1))))

    w_col = jnp.concatenate(
        [w_fused.reshape(K, C), b_fused.reshape(1, C)], axis=0)       # (K+1, C) f32
    w_col = jnp.pad(w_col, ((0, K_pad - (K + 1)), (0, C_pad - C))
                    ).astype(jnp.bfloat16)                            # (K_pad, C_pad)

    # ---- VMEM budget (double-buffered blocks + weights) and cost hint -------
    bytes_x = block_m * K_pad * 2
    bytes_o = block_m * C_pad * 2
    bytes_w = K_pad * C_pad * 2
    vmem_limit = int(min(max(2 * (bytes_x + bytes_o + bytes_w) + (4 << 20),
                             8 << 20), 64 << 20))
    cost = pl.CostEstimate(
        flops=2 * M_pad * K_pad * C_pad,
        bytes_accessed=M_pad * K_pad * 2 + K_pad * C_pad * 2 + M_pad * C_pad * 2,
        transcendentals=0)

    out2d = pl.pallas_call(
        _fused_residual_matmul_kernel,
        out_shape=jax.ShapeDtypeStruct((M_pad, C_pad), jnp.bfloat16),
        grid_spec=pltpu.PrefetchScalarGridSpec(
            num_scalar_prefetch=0,
            grid=(grid_m,),
            in_specs=[
                pl.BlockSpec((block_m, K_pad), lambda i: (i, 0)),
                pl.BlockSpec((K_pad, C_pad), lambda i: (0, 0)),
            ],
            out_specs=pl.BlockSpec((block_m, C_pad), lambda i: (i, 0)),
        ),
        compiler_params=pltpu.CompilerParams(
            dimension_semantics=("parallel",),
            vmem_limit_bytes=vmem_limit),
        cost_estimate=cost,
    )(x_col, w_col)

    # Drop row/channel padding, restore f32 NCHW (module contract is NCHW).
    out = out2d[:M, :C].astype(jnp.float32).reshape(N, H, W, C)
    return jnp.transpose(out, (0, 3, 1, 2))


def _reference(x_nchw, w_skip, b_skip, w_body, b_body):
    """Exact f32 reference (lax conv, HIGHEST precision), NCHW in/out."""
    x_nhwc = jnp.transpose(x_nchw, (0, 2, 3, 1))
    dn = jax.lax.conv_dimension_numbers(x_nhwc.shape, (1, 1, 1, 1),
                                        ("NHWC", "HWIO", "NHWC"))
    skip = jax.lax.conv_general_dilated(
        x_nhwc, w_skip.reshape(1, 1, *w_skip.shape), (1, 1), "SAME",
        dimension_numbers=dn, precision=jax.lax.Precision.HIGHEST) + b_skip
    body = jax.lax.conv_general_dilated(
        x_nhwc, w_body, (1, 1), "SAME", dimension_numbers=dn,
        precision=jax.lax.Precision.HIGHEST) + b_body
    return jnp.transpose(skip + body, (0, 3, 1, 2))


if __name__ == "__main__":
    N, C, H, W = 2, 36, 16, 16   # 36 channels to match ADN(36)

    key = jax.random.PRNGKey(0)
    kx, k1, k2, k3, k4 = jax.random.split(key, 5)

    x = jax.random.normal(kx, (N, C, H, W), dtype=jnp.float32)
    # skip (C_in, C_out) 1x1 matrix; body (3, 3, C_in, C_out) HWIO.
    w_skip = jax.random.normal(k1, (C, C), dtype=jnp.float32) * 0.05
    b_skip = jax.random.normal(k2, (C,), dtype=jnp.float32) * 0.05
    w_body = jax.random.normal(k3, (3, 3, C, C), dtype=jnp.float32) * 0.05
    b_body = jax.random.normal(k4, (C,), dtype=jnp.float32) * 0.05

    out = residual_forward(x, w_skip, b_skip, w_body, b_body)
    out = jax.block_until_ready(out)

    ref = _reference(x, w_skip, b_skip, w_body, b_body)
    assert out.shape == (N, C, H, W)
    # Tolerance sized for bf16 inputs/weights/output with f32 MXU accumulation
    # vs. an exact f32 reference (measured error << 1e-2 at these magnitudes).
    assert jnp.allclose(out, ref, rtol=2e-2, atol=2e-2), "mismatch vs reference"

    print("KERNEL_OK")
</pallas_src>

<mosaic_0001>
module attributes {stable_mosaic.version = 11 : i64} {
  func.func @_fused_residual_matmul_kernel(%arg0: i32, %arg1: memref<256x384xbf16, #tpu.memory_space<vmem>>, %arg2: memref<384x128xbf16, #tpu.memory_space<vmem>>, %arg3: memref<256x128xbf16, #tpu.memory_space<vmem>>) attributes {dimension_semantics = [#tpu.dimension_semantics<parallel>], iteration_bounds = array<i64: 2>, scalar_prefetch = 0 : i64, scratch_operands = 0 : i64, tpu.core_type = #tpu.core_type<tc>, window_params = [{transform_indices = @transform_0, window_bounds = array<i64: 256, 384>}, {pipeline_mode = #tpu.pipeline_mode<synchronous>, transform_indices = @transform_1, window_bounds = array<i64: 384, 128>}, {transform_indices = @transform_2, window_bounds = array<i64: 256, 128>}]} {
    %c0 = arith.constant 0 : index
    %c0_0 = arith.constant 0 : index
    %0 = vector.load %arg1[%c0, %c0_0] : memref<256x384xbf16, #tpu.memory_space<vmem>>, vector<256x384xbf16>
    %c0_1 = arith.constant 0 : index
    %c0_2 = arith.constant 0 : index
    %1 = vector.load %arg2[%c0_1, %c0_2] : memref<384x128xbf16, #tpu.memory_space<vmem>>, vector<384x128xbf16>
    %cst = arith.constant dense<0.000000e+00> : vector<256x128xf32>
    %2 = tpu.matmul %0, %1, %cst {dimension_numbers = #tpu.dot_dimension_numbers<[1], [0], [0], [1], [0, 0, 1, 1], [], []>} : vector<256x384xbf16>, vector<384x128xbf16>, vector<256x128xf32> -> vector<256x128xf32>
    %3 = arith.truncf %2 : vector<256x128xf32> to vector<256x128xbf16>
    %c0_3 = arith.constant 0 : index
    %c0_4 = arith.constant 0 : index
    %4 = vector.load %arg3[%c0_3, %c0_4] : memref<256x128xbf16, #tpu.memory_space<vmem>>, vector<256x128xbf16>
    tpu.vector_store %arg3[%c0_3, %c0_4], %3 {strides = array<i32>} : memref<256x128xbf16, #tpu.memory_space<vmem>>, vector<256x128xbf16>,
    return
  }
  func.func @transform_0(%arg0: i32) -> (i32, i32) {
    %c0_i32 = arith.constant 0 : i32
    %c0_i32_0 = arith.constant 0 : i32
    return %arg0, %c0_i32 : i32, i32
  }
  func.func @transform_1(%arg0: i32) -> (i32, i32) {
    %c0_i32 = arith.constant 0 : i32
    %c0_i32_0 = arith.constant 0 : i32
    %c0_i32_1 = arith.constant 0 : i32
    return %c0_i32, %c0_i32_0 : i32, i32
  }
  func.func @transform_2(%arg0: i32) -> (i32, i32) {
    %c0_i32 = arith.constant 0 : i32
    %c0_i32_0 = arith.constant 0 : i32
    return %arg0, %c0_i32 : i32, i32
  }
}

</mosaic_0001>

<llo_original>
// kernel: tpu_custom_call.1
$region0: #{tpu_custom_call.1}
  #allocation0 [shape = 'u32[]', space=smem, size = 0x4, offset = 0x4, fixed_abs, tag = 'smem constant byte address 0x4 - core index']
  #allocation1 [shape = 'u32[144,128]{1,0:T(1,128)}', space=vmem, size = 0x12000, scoped, tag = 'internal scratch']
  %s0 = inlined_call_operand.hbm [shape: bf16[512,384], index: 0, kind: input, shape index: {}]
  %s1 = inlined_call_operand.hbm [shape: bf16[384,128], index: 1, kind: input, shape index: {}]
  %s2 = inlined_call_operand.hbm [shape: bf16[512,128], index: 2, kind: output, shape index: {}]
  %s3 = sld [smem:[#allocation0]]
  $region49: #{tpu_custom_call.1} parent=0
    _
  %s5 = ssub.s32 1, %s3
  %s6 = scalar_select 0, %s5, %s3
  $region1: #{tpu_custom_call.1} parent=0
    #allocation2 [shape = 'u8[393216]{0}', space=vmem, size = 0x60000, scoped, tag = 'input window, operand 0']
    #allocation3 [shape = 's32[2]{0}', space=sflag, size = 0x8, scoped, tag = 'scoped memory for tpu_custom_call.1']
    #allocation4 [shape = 's32[2]{0}', space=sflag, size = 0x8, scoped, tag = 'scoped memory for tpu_custom_call.1']
    #allocation5 [shape = 'u8[98304]{0}', space=vmem, size = 0x18000, scoped, tag = 'input window, operand 1, single buffered']
    #allocation6 [shape = 's32[1]{0}', space=sflag, size = 0x4, scoped, tag = 'scoped memory for tpu_custom_call.1']
    #allocation7 [shape = 'u8[131072]{0}', space=vmem, size = 0x20000, scoped, tag = 'output window, operand 0']
    %7 = vsyncpa [#allocation3], 0
    %s8 = scalar_lea.sflag [#allocation3], 1
    %9 = vsyncpa %s8, 0
    %10 = vsyncpa [#allocation6], 0
    %11 = vsyncpa [#allocation4], 0
    %s12 = scalar_lea.sflag [#allocation4], 1
    %13 = vsyncpa %s12, 0
    loop: start=0, step=1, limit=4
    $region2: #{tpu_custom_call.1} parent=1 // loop_pre_header
      _
    $region3: #{tpu_custom_call.1} parent=1 // loop_header
      %s15 = sphi 0, %s19
      %p16 = scmp.ge.s32.totalorder %s15, 4
      %s25 = sphi 0, %s27
      %s28 = sphi 0, %s25
      %s29 = sphi 0, %s28
      %s45 = sphi 0, %s29
      %s49 = sphi 0, %s49
      %s51 = sphi 0, %s49
      %s52 = sphi 0, %s51
      %s66 = sphi 0, %s52
      %s72 = sphi 0, %s74
      %s75 = sphi 0, %s72
      %s76 = sphi 0, %s75
      %s92 = sphi 0, %s76
    $region4: #{tpu_custom_call.1} parent=1 // loop_header_branch
      %18 = sbr.rel (%p16) target = $region8
    $region5: #{tpu_custom_call.1} parent=1 // loop_body
      %s20 = ssub.s32 %s15, 1
      %s21 = ssub.s32 %s15, 2
      %s22 = sadd.s32 %s15, 1
      %s23 = ssub.s32 %s15, %s22
      %p24 = scmp.eq.s32.totalorder %s23, 0
      %s26 = sadd.s32 %s25, 1
      %s27 = scalar_select %p24, %s25, %s26
      %p30 = pneg %p24
      %p31 = scmp.eq.s32.totalorder %s15, 1
      %p32 = por %p30, %p31
      %p33 = scmp.ne.s32.totalorder %s25, %s28
      %p34 = scmp.eq.s32.totalorder %s15, 0
      %p35 = por %p33, %p34
      %p36 = scmp.ne.s32.totalorder %s25, %s28
      %p37 = scmp.eq.s32.totalorder %s20, 1
      %p38 = por %p36, %p37
      %p39 = scmp.ne.s32.totalorder %s28, %s29
      %p40 = scmp.eq.s32.totalorder %s20, 0
      %p41 = por %p39, %p40
      %p42 = scmp.ne.s32.totalorder %s28, %s29
      %p43 = scmp.eq.s32.totalorder %s21, 1
      %p44 = por %p42, %p43
      %p46 = scmp.ne.s32.totalorder %s29, %s45
      %p47 = scmp.eq.s32.totalorder %s21, 0
      %p48 = por %p46, %p47
      %s50 = sadd.s32 %s49, 1
      %p53 = scmp.eq.s32.totalorder %s15, 1
      %p54 = scmp.ne.s32.totalorder %s49, %s51
      %p55 = scmp.eq.s32.totalorder %s15, 0
      %p56 = por %p54, %p55
      %p57 = scmp.ne.s32.totalorder %s49, %s51
      %p58 = scmp.eq.s32.totalorder %s20, 1
      %p59 = por %p57, %p58
      %p60 = scmp.ne.s32.totalorder %s51, %s52
      %p61 = scmp.eq.s32.totalorder %s20, 0
      %p62 = por %p60, %p61
      %p63 = scmp.ne.s32.totalorder %s51, %s52
      %p64 = scmp.eq.s32.totalorder %s21, 1
      %p65 = por %p63, %p64
      %p67 = scmp.ne.s32.totalorder %s52, %s66
      %p68 = scmp.eq.s32.totalorder %s21, 0
      %p69 = por %p67, %p68
      %s70 = ssub.s32 %s15, %s22
      %p71 = scmp.eq.s32.totalorder %s70, 0
      %s73 = sadd.s32 %s72, 1
      %s74 = scalar_select %p71, %s72, %s73
      %p77 = pneg %p71
      %p78 = scmp.eq.s32.totalorder %s15, 1
      %p79 = por %p77, %p78
      %p80 = scmp.ne.s32.totalorder %s72, %s75
      %p81 = scmp.eq.s32.totalorder %s15, 0
      %p82 = por %p80, %p81
      %p83 = scmp.ne.s32.totalorder %s72, %s75
      %p84 = scmp.eq.s32.totalorder %s20, 1
      %p85 = por %p83, %p84
      %p86 = scmp.ne.s32.totalorder %s75, %s76
      %p87 = scmp.eq.s32.totalorder %s20, 0
      %p88 = por %p86, %p87
      %p89 = scmp.ne.s32.totalorder %s75, %s76
      %p90 = scmp.eq.s32.totalorder %s21, 1
      %p91 = por %p89, %p90
      %p93 = scmp.ne.s32.totalorder %s76, %s92
      %p94 = scmp.eq.s32.totalorder %s21, 0
      %p95 = por %p93, %p94
      %p96 = scmp.le.s32.totalorder 1, %s15
      %p97 = scmp.lt.s32.totalorder %s15, 3
      %p98 = pnand %p96, %p97
      %p99 = pneg %p98
      // Predicated region
      $region9: #{tpu_custom_call.1} parent=5 // pred_check
        _
      $region10: #{tpu_custom_call.1} parent=5 // pred_check_branch
        %101 = sbr.rel (%p98) target = $region12
      $region11: #{tpu_custom_call.1} parent=5 // pred_region
        %s102 = ssub.s32 %s15, 1
        // Predicated region
        $region13: #{tpu_custom_call.1} parent=11 // pred_check
          %p103 = pneg %p62
        $region14: #{tpu_custom_call.1} parent=11 // pred_check_branch
          %105 = sbr.rel (%p103) target = $region16
        $region15: #{tpu_custom_call.1} parent=11 // pred_region
          %s107 = ssub.s32 3072, 3072
          %108 = vsyncadd [#allocation6], %s107
          %s109 = sshll.u32 [#allocation5], 4
          %s110 = int_to_ptr.vmem [resolvable:$true] %s109
          %115 = dma.hbm_to_vmem [thread:$0]  %s1, 3072, %s110, [#allocation6], 64, 64, 4
        $region16: #{tpu_custom_call.1} parent=11 // pred_fallthru
          _
      $region12: #{tpu_custom_call.1} parent=5 // pred_fallthru
        _
      %p116 = scmp.lt.s32.totalorder %s15, 2
      // Predicated region
      $region17: #{tpu_custom_call.1} parent=5 // pred_check
        %p117 = pneg %p116
      $region18: #{tpu_custom_call.1} parent=5 // pred_check_branch
        %119 = sbr.rel (%p117) target = $region20
      $region19: #{tpu_custom_call.1} parent=5 // pred_region
        // Predicated region
        $region21: #{tpu_custom_call.1} parent=19 // pred_check
          %p120 = pneg %p35
        $region22: #{tpu_custom_call.1} parent=19 // pred_check_branch
          %122 = sbr.rel (%p120) target = $region24
        $region23: #{tpu_custom_call.1} parent=19 // pred_region
          %s123 = sand.u32 %s25, 1
          %s124 = scalar_lea.sflag [#allocation3], %s123
          %s125 = sand.u32 %s25, 1
          %s126 = smul.addr %s125, 384
          %s127 = scalar_lea.vmem [#allocation2], %s126
          %s128 = smul.u32 32, %s15
          %s130 = ssub.s32 6144, 6144
          %131 = vsyncadd %s124, %s130
          %s132 = smul.addr %s128, 3
          %s133 = smul.addr %s132, 64
          %s134 = scalar_lea.hbm %s0, %s133
          %s135 = sshll.u32 %s127, 4
          %s136 = int_to_ptr.vmem [resolvable:$true] %s135
          %141 = dma.hbm_to_vmem [thread:$0]  %s134, 6144, %s136, %s124, 192, 192, 12
        $region24: #{tpu_custom_call.1} parent=19 // pred_fallthru
          _
      $region20: #{tpu_custom_call.1} parent=5 // pred_fallthru
        _
      %p142 = scmp.le.s32.totalorder 1, %s15
      %p143 = scmp.lt.s32.totalorder %s15, 3
      %p144 = pnand %p142, %p143
      %p145 = pneg %p144
      // Predicated region
      $region25: #{tpu_custom_call.1} parent=5 // pred_check
        _
      $region26: #{tpu_custom_call.1} parent=5 // pred_check_branch
        %147 = sbr.rel (%p144) target = $region28
      $region27: #{tpu_custom_call.1} parent=5 // pred_region
        %s148 = ssub.s32 %s15, 1
        %s149 = sand.u32 %s28, 1
        %s150 = scalar_lea.sflag [#allocation3], %s149
        %s151 = sand.u32 %s28, 1
        %s152 = smul.addr %s151, 384
        %s153 = scalar_lea.vmem [#allocation2], %s152
        // Predicated region
        $region29: #{tpu_custom_call.1} parent=27 // pred_check
          %p154 = pneg %p41
        $region30: #{tpu_custom_call.1} parent=27 // pred_check_branch
          %156 = sbr.rel (%p154) target = $region32
        $region31: #{tpu_custom_call.1} parent=27 // pred_region
          %157 = dma.done %s150, 6144
        $region32: #{tpu_custom_call.1} parent=27 // pred_fallthru
          _
        // Predicated region
        $region33: #{tpu_custom_call.1} parent=27 // pred_check
          %p158 = pneg %p62
        $region34: #{tpu_custom_call.1} parent=27 // pred_check_branch
          %160 = sbr.rel (%p158) target = $region36
        $region35: #{tpu_custom_call.1} parent=27 // pred_region
          %161 = dma.done [#allocation6], 3072
        $region36: #{tpu_custom_call.1} parent=27 // pred_fallthru
          _
        %s162 = sand.u32 %s28, 1
        %s163 = scalar_lea.sflag [#allocation3], %s162
        %s164 = sand.u32 %s28, 1
        %s165 = smul.addr %s164, 384
        %s166 = scalar_lea.vmem [#allocation2], %s165
        %p167 = pneg %p41
        %p168 = pneg %p38
        %p169 = pneg %p62
        %p170 = pneg %p59
        %p171 = pneg %p88
        %p172 = pneg %p85
        %s173 = sand.u32 %s75, 1
        %s174 = scalar_lea.sflag [#allocation4], %s173
        %s175 = sand.u32 %s75, 1
        %s176 = smul.addr %s175, 128
        %s177 = scalar_lea.vmem [#allocation7], %s176
        %s178 = smul.u32 32, %s20
        %s179 = smul.u32 32, %s20
        %v181 = vld [vmem:[%s153] sm:$0xff]
        %v182 = vld [vmem:[%s153 + $0x8] sm:$0xf]
        %v183 = vld [vmem:[%s153 + $0xc] sm:$0xff]
        %v184 = vld [vmem:[%s153 + $0x14] sm:$0xf]
        %v185 = vld [vmem:[%s153 + $0x18] sm:$0xff]
        %v186 = vld [vmem:[%s153 + $0x20] sm:$0xf]
        %v187 = vld [vmem:[%s153 + $0x24] sm:$0xff]
        %v188 = vld [vmem:[%s153 + $0x2c] sm:$0xf]
        %v189 = vld [vmem:[%s153 + $0x30] sm:$0xff]
        %v190 = vld [vmem:[%s153 + $0x38] sm:$0xf]
        %v191 = vld [vmem:[%s153 + $0x3c] sm:$0xff]
        %v192 = vld [vmem:[%s153 + $0x44] sm:$0xf]
        %v193 = vld [vmem:[%s153 + $0x48] sm:$0xff]
        %v194 = vld [vmem:[%s153 + $0x50] sm:$0xf]
        %v195 = vld [vmem:[%s153 + $0x54] sm:$0xff]
        %v196 = vld [vmem:[%s153 + $0x5c] sm:$0xf]
        %v197 = vld [vmem:[%s153 + $0x60] sm:$0xff]
        %v198 = vld [vmem:[%s153 + $0x68] sm:$0xf]
        %v199 = vld [vmem:[%s153 + $0x6c] sm:$0xff]
        %v200 = vld [vmem:[%s153 + $0x74] sm:$0xf]
        %v201 = vld [vmem:[%s153 + $0x78] sm:$0xff]
        %v202 = vld [vmem:[%s153 + $0x80] sm:$0xf]
        %v203 = vld [vmem:[%s153 + $0x84] sm:$0xff]
        %v204 = vld [vmem:[%s153 + $0x8c] sm:$0xf]
        %v205 = vld [vmem:[%s153 + $0x90] sm:$0xff]
        %v206 = vld [vmem:[%s153 + $0x98] sm:$0xf]
        %v207 = vld [vmem:[%s153 + $0x9c] sm:$0xff]
        %v208 = vld [vmem:[%s153 + $0xa4] sm:$0xf]
        %v209 = vld [vmem:[%s153 + $0xa8] sm:$0xff]
        %v210 = vld [vmem:[%s153 + $0xb0] sm:$0xf]
        %v211 = vld [vmem:[%s153 + $0xb4] sm:$0xff]
        %v212 = vld [vmem:[%s153 + $0xbc] sm:$0xf]
        %v213 = vld [vmem:[%s153 + $0xc0] sm:$0xff]
        %v214 = vld [vmem:[%s153 + $0xc8] sm:$0xf]
        %v215 = vld [vmem:[%s153 + $0xcc] sm:$0xff]
        %v216 = vld [vmem:[%s153 + $0xd4] sm:$0xf]
        %v217 = vld [vmem:[%s153 + $0xd8] sm:$0xff]
        %v218 = vld [vmem:[%s153 + $0xe0] sm:$0xf]
        %v219 = vld [vmem:[%s153 + $0xe4] sm:$0xff]
        %v220 = vld [vmem:[%s153 + $0xec] sm:$0xf]
        %v221 = vld [vmem:[%s153 + $0xf0] sm:$0xff]
        %v222 = vld [vmem:[%s153 + $0xf8] sm:$0xf]
        %v223 = vld [vmem:[%s153 + $0xfc] sm:$0xff]
        %v224 = vld [vmem:[%s153 + $0x104] sm:$0xf]
        %v225 = vld [vmem:[%s153 + $0x108] sm:$0xff]
        %v226 = vld [vmem:[%s153 + $0x110] sm:$0xf]
        %v227 = vld [vmem:[%s153 + $0x114] sm:$0xff]
        %v228 = vld [vmem:[%s153 + $0x11c] sm:$0xf]
        %v229 = vld [vmem:[%s153 + $0x120] sm:$0xff]
        %v230 = vld [vmem:[%s153 + $0x128] sm:$0xf]
        %v231 = vld [vmem:[%s153 + $0x12c] sm:$0xff]
        %v232 = vld [vmem:[%s153 + $0x134] sm:$0xf]
        %v233 = vld [vmem:[%s153 + $0x138] sm:$0xff]
        %v234 = vld [vmem:[%s153 + $0x140] sm:$0xf]
        %v235 = vld [vmem:[%s153 + $0x144] sm:$0xff]
        %v236 = vld [vmem:[%s153 + $0x14c] sm:$0xf]
        %v237 = vld [vmem:[%s153 + $0x150] sm:$0xff]
        %v238 = vld [vmem:[%s153 + $0x158] sm:$0xf]
        %v239 = vld [vmem:[%s153 + $0x15c] sm:$0xff]
        %v240 = vld [vmem:[%s153 + $0x164] sm:$0xf]
        %v241 = vld [vmem:[%s153 + $0x168] sm:$0xff]
        %v242 = vld [vmem:[%s153 + $0x170] sm:$0xf]
        %v243 = vld [vmem:[%s153 + $0x174] sm:$0xff]
        %v244 = vld [vmem:[%s153 + $0x17c] sm:$0xf]
        %v245 = vld [vmem:[#allocation5] sm:$0xf]
        %v246 = vld [vmem:[#allocation5 + $0x4] sm:$0xf]
        %v247 = vld [vmem:[#allocation5 + $0x8] sm:$0xf]
        %v248 = vld [vmem:[#allocation5 + $0xc] sm:$0xf]
        %v249 = vld [vmem:[#allocation5 + $0x10] sm:$0xf]
        %v250 = vld [vmem:[#allocation5 + $0x14] sm:$0xf]
        %v251 = vld [vmem:[#allocation5 + $0x18] sm:$0xf]
        %v252 = vld [vmem:[#allocation5 + $0x1c] sm:$0xf]
        %v253 = vld [vmem:[#allocation5 + $0x20] sm:$0xf]
        %v254 = vld [vmem:[#allocation5 + $0x24] sm:$0xf]
        %v255 = vld [vmem:[#allocation5 + $0x28] sm:$0xf]
        %v256 = vld [vmem:[#allocation5 + $0x2c] sm:$0xf]
        %v257 = vld [vmem:[#allocation5 + $0x30] sm:$0xf]
        %v258 = vld [vmem:[#allocation5 + $0x34] sm:$0xf]
        %v259 = vld [vmem:[#allocation5 + $0x38] sm:$0xf]
        %v260 = vld [vmem:[#allocation5 + $0x3c] sm:$0xf]
        %v261 = vld [vmem:[#allocation5 + $0x40] sm:$0xf]
        %v262 = vld [vmem:[#allocation5 + $0x44] sm:$0xf]
        %v263 = vld [vmem:[#allocation5 + $0x48] sm:$0xf]
        %v264 = vld [vmem:[#allocation5 + $0x4c] sm:$0xf]
        %v265 = vld [vmem:[#allocation5 + $0x50] sm:$0xf]
        %v266 = vld [vmem:[#allocation5 + $0x54] sm:$0xf]
        %v267 = vld [vmem:[#allocation5 + $0x58] sm:$0xf]
        %v268 = vld [vmem:[#allocation5 + $0x5c] sm:$0xf]
        %v269 = vld [vmem:[#allocation5 + $0x60] sm:$0xf]
        %v270 = vld [vmem:[#allocation5 + $0x64] sm:$0xf]
        %v271 = vld [vmem:[#allocation5 + $0x68] sm:$0xf]
        %v272 = vld [vmem:[#allocation5 + $0x6c] sm:$0xf]
        %v273 = vld [vmem:[#allocation5 + $0x70] sm:$0xf]
        %v274 = vld [vmem:[#allocation5 + $0x74] sm:$0xf]
        %v275 = vld [vmem:[#allocation5 + $0x78] sm:$0xf]
        %v276 = vld [vmem:[#allocation5 + $0x7c] sm:$0xf]
        %v277 = vld [vmem:[#allocation5 + $0x80] sm:$0xf]
        %v278 = vld [vmem:[#allocation5 + $0x84] sm:$0xf]
        %v279 = vld [vmem:[#allocation5 + $0x88] sm:$0xf]
        %v280 = vld [vmem:[#allocation5 + $0x8c] sm:$0xf]
        %v281 = vld [vmem:[#allocation5 + $0x90] sm:$0xf]
        %v282 = vld [vmem:[#allocation5 + $0x94] sm:$0xf]
        %v283 = vld [vmem:[#allocation5 + $0x98] sm:$0xf]
        %v284 = vld [vmem:[#allocation5 + $0x9c] sm:$0xf]
        %v285 = vld [vmem:[#allocation5 + $0xa0] sm:$0xf]
        %v286 = vld [vmem:[#allocation5 + $0xa4] sm:$0xf]
        %v287 = vld [vmem:[#allocation5 + $0xa8] sm:$0xf]
        %v288 = vld [vmem:[#allocation5 + $0xac] sm:$0xf]
        %v289 = vld [vmem:[#allocation5 + $0xb0] sm:$0xf]
        %v290 = vld [vmem:[#allocation5 + $0xb4] sm:$0xf]
        %v291 = vld [vmem:[#allocation5 + $0xb8] sm:$0xf]
        %v292 = vld [vmem:[#allocation5 + $0xbc] sm:$0xf]
        %v357 = vunpack.c.l.b16 %v181
        %v358 = vunpack.c.h.b16 %v181
        %v359 = vunpack.c.l.b16 %v182
        %v360 = vunpack.c.l.b16 %v183
        %v361 = vunpack.c.h.b16 %v183
        %v362 = vunpack.c.l.b16 %v184
        %v363 = vunpack.c.l.b16 %v185
        %v364 = vunpack.c.h.b16 %v185
        %v365 = vunpack.c.l.b16 %v186
        %v366 = vunpack.c.l.b16 %v187
        %v367 = vunpack.c.h.b16 %v187
        %v368 = vunpack.c.l.b16 %v188
        %v369 = vunpack.c.l.b16 %v189
        %v370 = vunpack.c.h.b16 %v189
        %v371 = vunpack.c.l.b16 %v190
        %v372 = vunpack.c.l.b16 %v191
        %v373 = vunpack.c.h.b16 %v191
        %v374 = vunpack.c.l.b16 %v192
        %v375 = vunpack.c.l.b16 %v193
        %v376 = vunpack.c.h.b16 %v193
        %v377 = vunpack.c.l.b16 %v194
        %v378 = vunpack.c.l.b16 %v195
        %v379 = vunpack.c.h.b16 %v195
        %v380 = vunpack.c.l.b16 %v196
        %v381 = vunpack.c.l.b16 %v197
        %v382 = vunpack.c.h.b16 %v197
        %v383 = vunpack.c.l.b16 %v198
        %v384 = vunpack.c.l.b16 %v199
        %v385 = vunpack.c.h.b16 %v199
        %v386 = vunpack.c.l.b16 %v200
        %v387 = vunpack.c.l.b16 %v201
        %v388 = vunpack.c.h.b16 %v201
        %v389 = vunpack.c.l.b16 %v202
        %v390 = vunpack.c.l.b16 %v203
        %v391 = vunpack.c.h.b16 %v203
        %v392 = vunpack.c.l.b16 %v204
        %v393 = vunpack.c.l.b16 %v205
        %v394 = vunpack.c.h.b16 %v205
        %v395 = vunpack.c.l.b16 %v206
        %v396 = vunpack.c.l.b16 %v207
        %v397 = vunpack.c.h.b16 %v207
        %v398 = vunpack.c.l.b16 %v208
        %v399 = vunpack.c.l.b16 %v209
        %v400 = vunpack.c.h.b16 %v209
        %v401 = vunpack.c.l.b16 %v210
        %v402 = vunpack.c.l.b16 %v211
        %v403 = vunpack.c.h.b16 %v211
        %v404 = vunpack.c.l.b16 %v212
        %v405 = vunpack.c.l.b16 %v213
        %v406 = vunpack.c.h.b16 %v213
        %v407 = vunpack.c.l.b16 %v214
        %v408 = vunpack.c.l.b16 %v215
        %v409 = vunpack.c.h.b16 %v215
        %v410 = vunpack.c.l.b16 %v216
        %v411 = vunpack.c.l.b16 %v217
        %v412 = vunpack.c.h.b16 %v217
        %v413 = vunpack.c.l.b16 %v218
        %v414 = vunpack.c.l.b16 %v219
        %v415 = vunpack.c.h.b16 %v219
        %v416 = vunpack.c.l.b16 %v220
        %v417 = vunpack.c.l.b16 %v221
        %v418 = vunpack.c.h.b16 %v221
        %v419 = vunpack.c.l.b16 %v222
        %v420 = vunpack.c.l.b16 %v223
        %v421 = vunpack.c.h.b16 %v223
        %v422 = vunpack.c.l.b16 %v224
        %v423 = vunpack.c.l.b16 %v225
        %v424 = vunpack.c.h.b16 %v225
        %v425 = vunpack.c.l.b16 %v226
        %v426 = vunpack.c.l.b16 %v227
        %v427 = vunpack.c.h.b16 %v227
        %v428 = vunpack.c.l.b16 %v228
        %v429 = vunpack.c.l.b16 %v229
        %v430 = vunpack.c.h.b16 %v229
        %v431 = vunpack.c.l.b16 %v230
        %v432 = vunpack.c.l.b16 %v231
        %v433 = vunpack.c.h.b16 %v231
        %v434 = vunpack.c.l.b16 %v232
        %v435 = vunpack.c.l.b16 %v233
        %v436 = vunpack.c.h.b16 %v233
        %v437 = vunpack.c.l.b16 %v234
        %v438 = vunpack.c.l.b16 %v235
        %v439 = vunpack.c.h.b16 %v235
        %v440 = vunpack.c.l.b16 %v236
        %v441 = vunpack.c.l.b16 %v237
        %v442 = vunpack.c.h.b16 %v237
        %v443 = vunpack.c.l.b16 %v238
        %v444 = vunpack.c.l.b16 %v239
        %v445 = vunpack.c.h.b16 %v239
        %v446 = vunpack.c.l.b16 %v240
        %v447 = vunpack.c.l.b16 %v241
        %v448 = vunpack.c.h.b16 %v241
        %v449 = vunpack.c.l.b16 %v242
        %v450 = vunpack.c.l.b16 %v243
        %v451 = vunpack.c.h.b16 %v243
        %v452 = vunpack.c.l.b16 %v244
        %v453 = vpack.c.b16 %v360, %v357
        %v454 = vpack.c.b16 %v361, %v358
        %v455 = vpack.c.b16 %v362, %v359
        %v456 = vpack.c.b16 %v366, %v363
        %v457 = vpack.c.b16 %v367, %v364
        %v458 = vpack.c.b16 %v368, %v365
        %v459 = vpack.c.b16 %v372, %v369
        %v460 = vpack.c.b16 %v373, %v370
        %v461 = vpack.c.b16 %v374, %v371
        %v462 = vpack.c.b16 %v378, %v375
        %v463 = vpack.c.b16 %v379, %v376
        %v464 = vpack.c.b16 %v380, %v377
        %v465 = vpack.c.b16 %v384, %v381
        %v466 = vpack.c.b16 %v385, %v382
        %v467 = vpack.c.b16 %v386, %v383
        %v468 = vpack.c.b16 %v390, %v387
        %v469 = vpack.c.b16 %v391, %v388
        %v470 = vpack.c.b16 %v392, %v389
        %v471 = vpack.c.b16 %v396, %v393
        %v472 = vpack.c.b16 %v397, %v394
        %v473 = vpack.c.b16 %v398, %v395
        %v474 = vpack.c.b16 %v402, %v399
        %v475 = vpack.c.b16 %v403, %v400
        %v476 = vpack.c.b16 %v404, %v401
        %v477 = vpack.c.b16 %v408, %v405
        %v478 = vpack.c.b16 %v409, %v406
        %v479 = vpack.c.b16 %v410, %v407
        %v480 = vpack.c.b16 %v414, %v411
        %v481 = vpack.c.b16 %v415, %v412
        %v482 = vpack.c.b16 %v416, %v413
        %v483 = vpack.c.b16 %v420, %v417
        %v484 = vpack.c.b16 %v421, %v418
        %v485 = vpack.c.b16 %v422, %v419
        %v486 = vpack.c.b16 %v426, %v423
        %v487 = vpack.c.b16 %v427, %v424
        %v488 = vpack.c.b16 %v428, %v425
        %v489 = vpack.c.b16 %v432, %v429
        %v490 = vpack.c.b16 %v433, %v430
        %v491 = vpack.c.b16 %v434, %v431
        %v492 = vpack.c.b16 %v438, %v435
        %v493 = vpack.c.b16 %v439, %v436
        %v494 = vpack.c.b16 %v440, %v437
        %v495 = vpack.c.b16 %v444, %v441
        %v496 = vpack.c.b16 %v445, %v442
        %v497 = vpack.c.b16 %v446, %v443
        %v498 = vpack.c.b16 %v450, %v447
        %v499 = vpack.c.b16 %v451, %v448
        %v500 = vpack.c.b16 %v452, %v449
        %v597 = vunpack.c.l.b16 %v245
        %v598 = vunpack.c.l.b16 %v246
        %v599 = vunpack.c.l.b16 %v247
        %v600 = vunpack.c.l.b16 %v248
        %v601 = vunpack.c.l.b16 %v249
        %v602 = vunpack.c.l.b16 %v250
        %v603 = vunpack.c.l.b16 %v251
        %v604 = vunpack.c.l.b16 %v252
        %v605 = vunpack.c.l.b16 %v253
        %v606 = vunpack.c.l.b16 %v254
        %v607 = vunpack.c.l.b16 %v255
        %v608 = vunpack.c.l.b16 %v256
        %v609 = vunpack.c.l.b16 %v257
        %v610 = vunpack.c.l.b16 %v258
        %v611 = vunpack.c.l.b16 %v259
        %v612 = vunpack.c.l.b16 %v260
        %v613 = vunpack.c.l.b16 %v261
        %v614 = vunpack.c.l.b16 %v262
        %v615 = vunpack.c.l.b16 %v263
        %v616 = vunpack.c.l.b16 %v264
        %v617 = vunpack.c.l.b16 %v265
        %v618 = vunpack.c.l.b16 %v266
        %v619 = vunpack.c.l.b16 %v267
        %v620 = vunpack.c.l.b16 %v268
        %v621 = vunpack.c.l.b16 %v269
        %v622 = vunpack.c.l.b16 %v270
        %v623 = vunpack.c.l.b16 %v271
        %v624 = vunpack.c.l.b16 %v272
        %v625 = vunpack.c.l.b16 %v273
        %v626 = vunpack.c.l.b16 %v274
        %v627 = vunpack.c.l.b16 %v275
        %v628 = vunpack.c.l.b16 %v276
        %v629 = vunpack.c.l.b16 %v277
        %v630 = vunpack.c.l.b16 %v278
        %v631 = vunpack.c.l.b16 %v279
        %v632 = vunpack.c.l.b16 %v280
        %v633 = vunpack.c.l.b16 %v281
        %v634 = vunpack.c.l.b16 %v282
        %v635 = vunpack.c.l.b16 %v283
        %v636 = vunpack.c.l.b16 %v284
        %v637 = vunpack.c.l.b16 %v285
        %v638 = vunpack.c.l.b16 %v286
        %v639 = vunpack.c.l.b16 %v287
        %v640 = vunpack.c.l.b16 %v288
        %v641 = vunpack.c.l.b16 %v289
        %v642 = vunpack.c.l.b16 %v290
        %v643 = vunpack.c.l.b16 %v291
        %v644 = vunpack.c.l.b16 %v292
        %v645 = vpack.c.b16 %v598, %v597
        %v646 = vpack.c.b16 %v600, %v599
        %v647 = vpack.c.b16 %v602, %v601
        %v648 = vpack.c.b16 %v604, %v603
        %v649 = vpack.c.b16 %v606, %v605
        %v650 = vpack.c.b16 %v608, %v607
        %v651 = vpack.c.b16 %v610, %v609
        %v652 = vpack.c.b16 %v612, %v611
        %v653 = vpack.c.b16 %v614, %v613
        %v654 = vpack.c.b16 %v616, %v615
        %v655 = vpack.c.b16 %v618, %v617
        %v656 = vpack.c.b16 %v620, %v619
        %v657 = vpack.c.b16 %v622, %v621
        %v658 = vpack.c.b16 %v624, %v623
        %v659 = vpack.c.b16 %v626, %v625
        %v660 = vpack.c.b16 %v628, %v627
        %v661 = vpack.c.b16 %v630, %v629
        %v662 = vpack.c.b16 %v632, %v631
        %v663 = vpack.c.b16 %v634, %v633
        %v664 = vpack.c.b16 %v636, %v635
        %v665 = vpack.c.b16 %v638, %v637
        %v666 = vpack.c.b16 %v640, %v639
        %v667 = vpack.c.b16 %v642, %v641
        %v668 = vpack.c.b16 %v644, %v643
        %693 = vmatprep.subr.bf16.mxu0 0
        %694 = vmatpush1.bf16.msra.mxu0 %v652
        %695 = vmatprep.subr.bf16.mxu0 0
        %696 = vmatpush1.bf16.msra.mxu0 %v651
        %697 = vmatprep.subr.bf16.mxu0 0
        %698 = vmatpush1.bf16.msra.mxu0 %v650
        %699 = vmatprep.subr.bf16.mxu0 0
        %700 = vmatpush1.bf16.msra.mxu0 %v649
        %701 = vmatprep.subr.bf16.mxu0 0
        %702 = vmatpush1.bf16.msra.mxu0 %v648
        %703 = vmatprep.subr.bf16.mxu0 0
        %704 = vmatpush1.bf16.msra.mxu0 %v647
        %705 = vmatprep.subr.bf16.mxu0 0
        %706 = vmatpush1.bf16.msra.mxu0 %v646
        %707 = vmatprep.subr.bf16.mxu0 0
        %708 = vmatpush1.bf16.msra.mxu0 %v645
        %709 = vmatprep.subr.bf16.mxu0 0
        %710 = vmatpush2.bf16.msra.mxu0 %v660
        %711 = vmatprep.subr.bf16.mxu0 0
        %712 = vmatpush2.bf16.msra.mxu0 %v659
        %713 = vmatprep.subr.bf16.mxu0 0
        %714 = vmatpush2.bf16.msra.mxu0 %v658
        %715 = vmatprep.subr.bf16.mxu0 0
        %716 = vmatpush2.bf16.msra.mxu0 %v657
        %717 = vmatprep.subr.bf16.mxu0 0
        %718 = vmatpush2.bf16.msra.mxu0 %v656
        %719 = vmatprep.subr.bf16.mxu0 0
        %720 = vmatpush2.bf16.msra.mxu0 %v655
        %721 = vmatprep.subr.bf16.mxu0 0
        %722 = vmatpush2.bf16.msra.mxu0 %v654
        %723 = vmatprep.subr.bf16.mxu0 0
        %724 = vmatpush2.bf16.msra.mxu0 %v653
        %725 = vmatprep.mubr.bf16.mxu0 %v454
        %726 = vmatmul.mubr.bf16.gmra.mxu0 %v453
        %v727 = vpop.f32.mrf.mxu0
        %v728 = vadd.f32 0.0, %v727
        %v729 = vpop.f32.mrf.mxu0
        %v730 = vpop.f32.mrf.mxu0
        %v731 = vadd.f32 0.0, %v730
        %v732 = vpop.f32.mrf.mxu0
        %733 = vmatprep.mubr.bf16.mxu0 %v457
        %734 = vmatmul.mubr.bf16.gmra.mxu0 %v456
        %v735 = vpop.f32.mrf.mxu0
        %v736 = vadd.f32 0.0, %v735
        %v737 = vpop.f32.mrf.mxu0
        %v738 = vpop.f32.mrf.mxu0
        %v739 = vadd.f32 0.0, %v738
        %v740 = vpop.f32.mrf.mxu0
        %741 = vmatprep.mubr.bf16.mxu0 %v460
        %742 = vmatmul.mubr.bf16.gmra.mxu0 %v459
        %v743 = vpop.f32.mrf.mxu0
        %v744 = vadd.f32 0.0, %v743
        %v745 = vpop.f32.mrf.mxu0
        %v746 = vpop.f32.mrf.mxu0
        %v747 = vadd.f32 0.0, %v746
        %v748 = vpop.f32.mrf.mxu0
        %749 = vmatprep.mubr.bf16.mxu0 %v463
        %750 = vmatmul.mubr.bf16.gmra.mxu0 %v462
        %v751 = vpop.f32.mrf.mxu0
        %v752 = vadd.f32 0.0, %v751
        %v753 = vpop.f32.mrf.mxu0
        %v754 = vpop.f32.mrf.mxu0
        %v755 = vadd.f32 0.0, %v754
        %v756 = vpop.f32.mrf.mxu0
        %757 = vmatprep.mubr.bf16.mxu0 %v466
        %758 = vmatmul.mubr.bf16.gmra.mxu0 %v465
        %v759 = vpop.f32.mrf.mxu0
        %v760 = vadd.f32 0.0, %v759
        %v761 = vpop.f32.mrf.mxu0
        %v762 = vpop.f32.mrf.mxu0
        %v763 = vadd.f32 0.0, %v762
        %v764 = vpop.f32.mrf.mxu0
        %765 = vmatprep.mubr.bf16.mxu0 %v469
        %766 = vmatmul.mubr.bf16.gmra.mxu0 %v468
        %v767 = vpop.f32.mrf.mxu0
        %v768 = vadd.f32 0.0, %v767
        %v769 = vpop.f32.mrf.mxu0
        %v770 = vpop.f32.mrf.mxu0
        %v771 = vadd.f32 0.0, %v770
        %v772 = vpop.f32.mrf.mxu0
        %773 = vmatprep.mubr.bf16.mxu0 %v472
        %774 = vmatmul.mubr.bf16.gmra.mxu0 %v471
        %v775 = vpop.f32.mrf.mxu0
        %v776 = vadd.f32 0.0, %v775
        %v777 = vpop.f32.mrf.mxu0
        %v778 = vpop.f32.mrf.mxu0
        %v779 = vadd.f32 0.0, %v778
        %v780 = vpop.f32.mrf.mxu0
        %781 = vmatprep.mubr.bf16.mxu0 %v475
        %782 = vmatmul.mubr.bf16.gmra.mxu0 %v474
        %v783 = vpop.f32.mrf.mxu0
        %v784 = vadd.f32 0.0, %v783
        %v785 = vpop.f32.mrf.mxu0
        %v786 = vpop.f32.mrf.mxu0
        %v787 = vadd.f32 0.0, %v786
        %v788 = vpop.f32.mrf.mxu0
        %789 = vmatprep.mubr.bf16.mxu0 %v478
        %790 = vmatmul.mubr.bf16.gmra.mxu0 %v477
        %v791 = vpop.f32.mrf.mxu0
        %v792 = vadd.f32 0.0, %v791
        %v793 = vpop.f32.mrf.mxu0
        %v794 = vpop.f32.mrf.mxu0
        %v795 = vadd.f32 0.0, %v794
        %v796 = vpop.f32.mrf.mxu0
        %797 = vmatprep.mubr.bf16.mxu0 %v481
        %798 = vmatmul.mubr.bf16.gmra.mxu0 %v480
        %v799 = vpop.f32.mrf.mxu0
        %v800 = vadd.f32 0.0, %v799
        %v801 = vpop.f32.mrf.mxu0
        %v802 = vpop.f32.mrf.mxu0
        %v803 = vadd.f32 0.0, %v802
        %v804 = vpop.f32.mrf.mxu0
        %805 = vmatprep.mubr.bf16.mxu0 %v484
        %806 = vmatmul.mubr.bf16.gmra.mxu0 %v483
        %v807 = vpop.f32.mrf.mxu0
        %v808 = vadd.f32 0.0, %v807
        %v809 = vpop.f32.mrf.mxu0
        %v810 = vpop.f32.mrf.mxu0
        %v811 = vadd.f32 0.0, %v810
        %v812 = vpop.f32.mrf.mxu0
        %813 = vmatprep.mubr.bf16.mxu0 %v487
        %814 = vmatmul.mubr.bf16.gmra.mxu0 %v486
        %v815 = vpop.f32.mrf.mxu0
        %v816 = vadd.f32 0.0, %v815
        %v817 = vpop.f32.mrf.mxu0
        %v818 = vpop.f32.mrf.mxu0
        %v819 = vadd.f32 0.0, %v818
        %v820 = vpop.f32.mrf.mxu0
        %821 = vmatprep.mubr.bf16.mxu0 %v490
        %822 = vmatmul.mubr.bf16.gmra.mxu0 %v489
        %v823 = vpop.f32.mrf.mxu0
        %v824 = vadd.f32 0.0, %v823
        %v825 = vpop.f32.mrf.mxu0
        %v826 = vpop.f32.mrf.mxu0
        %v827 = vadd.f32 0.0, %v826
        %v828 = vpop.f32.mrf.mxu0
        %829 = vmatprep.mubr.bf16.mxu0 %v493
        %830 = vmatmul.mubr.bf16.gmra.mxu0 %v492
        %v831 = vpop.f32.mrf.mxu0
        %v832 = vadd.f32 0.0, %v831
        %v833 = vpop.f32.mrf.mxu0
        %v834 = vpop.f32.mrf.mxu0
        %v835 = vadd.f32 0.0, %v834
        %v836 = vpop.f32.mrf.mxu0
        %837 = vmatprep.mubr.bf16.mxu0 %v496
        %838 = vmatmul.mubr.bf16.gmra.mxu0 %v495
        %v839 = vpop.f32.mrf.mxu0
        %v840 = vadd.f32 0.0, %v839
        %v841 = vpop.f32.mrf.mxu0
        %v842 = vpop.f32.mrf.mxu0
        %v843 = vadd.f32 0.0, %v842
        %v844 = vpop.f32.mrf.mxu0
        %845 = vmatprep.mubr.bf16.mxu0 %v499
        %846 = vmatmul.mubr.bf16.gmra.mxu0 %v498
        %v847 = vpop.f32.mrf.mxu0
        %v848 = vadd.f32 0.0, %v847
        %v849 = vpop.f32.mrf.mxu0
        %v850 = vpop.f32.mrf.mxu0
        %v851 = vadd.f32 0.0, %v850
        %v852 = vpop.f32.mrf.mxu0
        %853 = vdwg.mxu0
        %854 = vmatprep.subr.bf16.mxu0 0
        %855 = vmatpush1.bf16.msra.mxu0 %v668
        %856 = vmatprep.subr.bf16.mxu0 0
        %857 = vmatpush1.bf16.msra.mxu0 %v667
        %858 = vmatprep.subr.bf16.mxu0 0
        %859 = vmatpush1.bf16.msra.mxu0 %v666
        %860 = vmatprep.subr.bf16.mxu0 0
        %861 = vmatpush1.bf16.msra.mxu0 %v665
        %862 = vmatprep.subr.bf16.mxu0 0
        %863 = vmatpush1.bf16.msra.mxu0 %v664
        %864 = vmatprep.subr.bf16.mxu0 0
        %865 = vmatpush1.bf16.msra.mxu0 %v663
        %866 = vmatprep.subr.bf16.mxu0 0
        %867 = vmatpush1.bf16.msra.mxu0 %v662
        %868 = vmatprep.subr.bf16.mxu0 0
        %869 = vmatpush1.bf16.msra.mxu0 %v661
        %870 = vmatprep.subr.bf16.mxu0 0
        %871 = vmatpush2.bf16.msra.mxu0 0
        %872 = vmatprep.subr.bf16.mxu0 0
        %873 = vmatpush2.bf16.msra.mxu0 0
        %874 = vmatprep.subr.bf16.mxu0 0
        %875 = vmatpush2.bf16.msra.mxu0 0
        %876 = vmatprep.subr.bf16.mxu0 0
        %877 = vmatpush2.bf16.msra.mxu0 0
        %878 = vmatprep.subr.bf16.mxu0 0
        %879 = vmatpush2.bf16.msra.mxu0 0
        %880 = vmatprep.subr.bf16.mxu0 0
        %881 = vmatpush2.bf16.msra.mxu0 0
        %882 = vmatprep.subr.bf16.mxu0 0
        %883 = vmatpush2.bf16.msra.mxu0 0
        %884 = vmatprep.subr.bf16.mxu0 0
        %885 = vmatpush2.bf16.msra.mxu0 0
        %886 = vmatprep.mubr.bf16.mxu0 0
        %887 = vmatmul.mubr.bf16.gmra.mxu0 %v455
        %v888 = vpop.f32.mrf.mxu0
        %v889 = vadd.f32 %v728, %v888
        %v890 = vpop.f32.mrf.mxu0
        %v891 = vpop.f32.mrf.mxu0
        %v892 = vadd.f32 %v731, %v891
        %v893 = vpop.f32.mrf.mxu0
        %894 = vmatprep.mubr.bf16.mxu0 0
        %895 = vmatmul.mubr.bf16.gmra.mxu0 %v458
        %v896 = vpop.f32.mrf.mxu0
        %v897 = vadd.f32 %v736, %v896
        %v898 = vpop.f32.mrf.mxu0
        %v899 = vpop.f32.mrf.mxu0
        %v900 = vadd.f32 %v739, %v899
        %v901 = vpop.f32.mrf.mxu0
        %902 = vmatprep.mubr.bf16.mxu0 0
        %903 = vmatmul.mubr.bf16.gmra.mxu0 %v461
        %v904 = vpop.f32.mrf.mxu0
        %v905 = vadd.f32 %v744, %v904
        %v906 = vpop.f32.mrf.mxu0
        %v907 = vpop.f32.mrf.mxu0
        %v908 = vadd.f32 %v747, %v907
        %v909 = vpop.f32.mrf.mxu0
        %910 = vmatprep.mubr.bf16.mxu0 0
        %911 = vmatmul.mubr.bf16.gmra.mxu0 %v464
        %v912 = vpop.f32.mrf.mxu0
        %v913 = vadd.f32 %v752, %v912
        %v914 = vpop.f32.mrf.mxu0
        %v915 = vpop.f32.mrf.mxu0
        %v916 = vadd.f32 %v755, %v915
        %v917 = vpop.f32.mrf.mxu0
        %918 = vmatprep.mubr.bf16.mxu0 0
        %919 = vmatmul.mubr.bf16.gmra.mxu0 %v467
        %v920 = vpop.f32.mrf.mxu0
        %v921 = vadd.f32 %v760, %v920
        %v922 = vpop.f32.mrf.mxu0
        %v923 = vpop.f32.mrf.mxu0
        %v924 = vadd.f32 %v763, %v923
        %v925 = vpop.f32.mrf.mxu0
        %926 = vmatprep.mubr.bf16.mxu0 0
        %927 = vmatmul.mubr.bf16.gmra.mxu0 %v470
        %v928 = vpop.f32.mrf.mxu0
        %v929 = vadd.f32 %v768, %v928
        %v930 = vpop.f32.mrf.mxu0
        %v931 = vpop.f32.mrf.mxu0
        %v932 = vadd.f32 %v771, %v931
        %v933 = vpop.f32.mrf.mxu0
        %934 = vmatprep.mubr.bf16.mxu0 0
        %935 = vmatmul.mubr.bf16.gmra.mxu0 %v473
        %v936 = vpop.f32.mrf.mxu0
        %v937 = vadd.f32 %v776, %v936
        %v938 = vpop.f32.mrf.mxu0
        %v939 = vpop.f32.mrf.mxu0
        %v940 = vadd.f32 %v779, %v939
        %v941 = vpop.f32.mrf.mxu0
        %942 = vmatprep.mubr.bf16.mxu0 0
        %943 = vmatmul.mubr.bf16.gmra.mxu0 %v476
        %v944 = vpop.f32.mrf.mxu0
        %v945 = vadd.f32 %v784, %v944
        %v946 = vpop.f32.mrf.mxu0
        %v947 = vpop.f32.mrf.mxu0
        %v948 = vadd.f32 %v787, %v947
        %v949 = vpop.f32.mrf.mxu0
        %950 = vmatprep.mubr.bf16.mxu0 0
        %951 = vmatmul.mubr.bf16.gmra.mxu0 %v479
        %v952 = vpop.f32.mrf.mxu0
        %v953 = vadd.f32 %v792, %v952
        %v954 = vpop.f32.mrf.mxu0
        %v955 = vpop.f32.mrf.mxu0
        %v956 = vadd.f32 %v795, %v955
        %v957 = vpop.f32.mrf.mxu0
        %958 = vmatprep.mubr.bf16.mxu0 0
        %959 = vmatmul.mubr.bf16.gmra.mxu0 %v482
        %v960 = vpop.f32.mrf.mxu0
        %v961 = vadd.f32 %v800, %v960
        %v962 = vpop.f32.mrf.mxu0
        %v963 = vpop.f32.mrf.mxu0
        %v964 = vadd.f32 %v803, %v963
        %v965 = vpop.f32.mrf.mxu0
        %966 = vmatprep.mubr.bf16.mxu0 0
        %967 = vmatmul.mubr.bf16.gmra.mxu0 %v485
        %v968 = vpop.f32.mrf.mxu0
        %v969 = vadd.f32 %v808, %v968
        %v970 = vpop.f32.mrf.mxu0
        %v971 = vpop.f32.mrf.mxu0
        %v972 = vadd.f32 %v811, %v971
        %v973 = vpop.f32.mrf.mxu0
        %974 = vmatprep.mubr.bf16.mxu0 0
        %975 = vmatmul.mubr.bf16.gmra.mxu0 %v488
        %v976 = vpop.f32.mrf.mxu0
        %v977 = vadd.f32 %v816, %v976
        %v978 = vpop.f32.mrf.mxu0
        %v979 = vpop.f32.mrf.mxu0
        %v980 = vadd.f32 %v819, %v979
        %v981 = vpop.f32.mrf.mxu0
        %982 = vmatprep.mubr.bf16.mxu0 0
        %983 = vmatmul.mubr.bf16.gmra.mxu0 %v491
        %v984 = vpop.f32.mrf.mxu0
        %v985 = vadd.f32 %v824, %v984
        %v986 = vpop.f32.mrf.mxu0
        %v987 = vpop.f32.mrf.mxu0
        %v988 = vadd.f32 %v827, %v987
        %v989 = vpop.f32.mrf.mxu0
        %990 = vmatprep.mubr.bf16.mxu0 0
        %991 = vmatmul.mubr.bf16.gmra.mxu0 %v494
        %v992 = vpop.f32.mrf.mxu0
        %v993 = vadd.f32 %v832, %v992
        %v994 = vpop.f32.mrf.mxu0
        %v995 = vpop.f32.mrf.mxu0
        %v996 = vadd.f32 %v835, %v995
        %v997 = vpop.f32.mrf.mxu0
        %998 = vmatprep.mubr.bf16.mxu0 0
        %999 = vmatmul.mubr.bf16.gmra.mxu0 %v497
        %v1000 = vpop.f32.mrf.mxu0
        %v1001 = vadd.f32 %v840, %v1000
        %v1002 = vpop.f32.mrf.mxu0
        %v1003 = vpop.f32.mrf.mxu0
        %v1004 = vadd.f32 %v843, %v1003
        %v1005 = vpop.f32.mrf.mxu0
        %1006 = vmatprep.mubr.bf16.mxu0 0
        %1007 = vmatmul.mubr.bf16.gmra.mxu0 %v500
        %v1008 = vpop.f32.mrf.mxu0
        %v1009 = vadd.f32 %v848, %v1008
        %v1010 = vpop.f32.mrf.mxu0
        %v1011 = vpop.f32.mrf.mxu0
        %v1012 = vadd.f32 %v851, %v1011
        %v1013 = vpop.f32.mrf.mxu0
        %1014 = vdwg.mxu0
        %v1015 = vpack.c.bf16 %v892, %v889
        %v1016 = vpack.c.bf16 %v900, %v897
        %v1017 = vpack.c.bf16 %v908, %v905
        %v1018 = vpack.c.bf16 %v916, %v913
        %v1019 = vpack.c.bf16 %v924, %v921
        %v1020 = vpack.c.bf16 %v932, %v929
        %v1021 = vpack.c.bf16 %v940, %v937
        %v1022 = vpack.c.bf16 %v948, %v945
        %v1023 = vpack.c.bf16 %v956, %v953
        %v1024 = vpack.c.bf16 %v964, %v961
        %v1025 = vpack.c.bf16 %v972, %v969
        %v1026 = vpack.c.bf16 %v980, %v977
        %v1027 = vpack.c.bf16 %v988, %v985
        %v1028 = vpack.c.bf16 %v996, %v993
        %v1029 = vpack.c.bf16 %v1004, %v1001
        %v1030 = vpack.c.bf16 %v1012, %v1009
        %v1047 = vunpack.c.l.b16 %v1015
        %v1048 = vunpack.c.h.b16 %v1015
        %v1049 = vunpack.c.l.b16 %v1016
        %v1050 = vunpack.c.h.b16 %v1016
        %v1051 = vunpack.c.l.b16 %v1017
        %v1052 = vunpack.c.h.b16 %v1017
        %v1053 = vunpack.c.l.b16 %v1018
        %v1054 = vunpack.c.h.b16 %v1018
        %v1055 = vunpack.c.l.b16 %v1019
        %v1056 = vunpack.c.h.b16 %v1019
        %v1057 = vunpack.c.l.b16 %v1020
        %v1058 = vunpack.c.h.b16 %v1020
        %v1059 = vunpack.c.l.b16 %v1021
        %v1060 = vunpack.c.h.b16 %v1021
        %v1061 = vunpack.c.l.b16 %v1022
        %v1062 = vunpack.c.h.b16 %v1022
        %v1063 = vunpack.c.l.b16 %v1023
        %v1064 = vunpack.c.h.b16 %v1023
        %v1065 = vunpack.c.l.b16 %v1024
        %v1066 = vunpack.c.h.b16 %v1024
        %v1067 = vunpack.c.l.b16 %v1025
        %v1068 = vunpack.c.h.b16 %v1025
        %v1069 = vunpack.c.l.b16 %v1026
        %v1070 = vunpack.c.h.b16 %v1026
        %v1071 = vunpack.c.l.b16 %v1027
        %v1072 = vunpack.c.h.b16 %v1027
        %v1073 = vunpack.c.l.b16 %v1028
        %v1074 = vunpack.c.h.b16 %v1028
        %v1075 = vunpack.c.l.b16 %v1029
        %v1076 = vunpack.c.h.b16 %v1029
        %v1077 = vunpack.c.l.b16 %v1030
        %v1078 = vunpack.c.h.b16 %v1030
        %v1079 = vpack.c.b16 %v1047, %v1047
        %v1080 = vpack.c.b16 %v1048, %v1048
        %v1081 = vpack.c.b16 %v1049, %v1049
        %v1082 = vpack.c.b16 %v1050, %v1050
        %v1083 = vpack.c.b16 %v1051, %v1051
        %v1084 = vpack.c.b16 %v1052, %v1052
        %v1085 = vpack.c.b16 %v1053, %v1053
        %v1086 = vpack.c.b16 %v1054, %v1054
        %v1087 = vpack.c.b16 %v1055, %v1055
        %v1088 = vpack.c.b16 %v1056, %v1056
        %v1089 = vpack.c.b16 %v1057, %v1057
        %v1090 = vpack.c.b16 %v1058, %v1058
        %v1091 = vpack.c.b16 %v1059, %v1059
        %v1092 = vpack.c.b16 %v1060, %v1060
        %v1093 = vpack.c.b16 %v1061, %v1061
        %v1094 = vpack.c.b16 %v1062, %v1062
        %v1095 = vpack.c.b16 %v1063, %v1063
        %v1096 = vpack.c.b16 %v1064, %v1064
        %v1097 = vpack.c.b16 %v1065, %v1065
        %v1098 = vpack.c.b16 %v1066, %v1066
        %v1099 = vpack.c.b16 %v1067, %v1067
        %v1100 = vpack.c.b16 %v1068, %v1068
        %v1101 = vpack.c.b16 %v1069, %v1069
        %v1102 = vpack.c.b16 %v1070, %v1070
        %v1103 = vpack.c.b16 %v1071, %v1071
        %v1104 = vpack.c.b16 %v1072, %v1072
        %v1105 = vpack.c.b16 %v1073, %v1073
        %v1106 = vpack.c.b16 %v1074, %v1074
        %v1107 = vpack.c.b16 %v1075, %v1075
        %v1108 = vpack.c.b16 %v1076, %v1076
        %v1109 = vpack.c.b16 %v1077, %v1077
        %v1110 = vpack.c.b16 %v1078, %v1078
        %1143 = vst [vmem:[%s177] sm:$0xf] %v1079
        %1144 = vst [vmem:[%s177 + $0x4] sm:$0xf] %v1080
        %1145 = vst [vmem:[%s177 + $0x8] sm:$0xf] %v1081
        %1146 = vst [vmem:[%s177 + $0xc] sm:$0xf] %v1082
        %1147 = vst [vmem:[%s177 + $0x10] sm:$0xf] %v1083
        %1148 = vst [vmem:[%s177 + $0x14] sm:$0xf] %v1084
        %1149 = vst [vmem:[%s177 + $0x18] sm:$0xf] %v1085
        %1150 = vst [vmem:[%s177 + $0x1c] sm:$0xf] %v1086
        %1151 = vst [vmem:[%s177 + $0x20] sm:$0xf] %v1087
        %1152 = vst [vmem:[%s177 + $0x24] sm:$0xf] %v1088
        %1153 = vst [vmem:[%s177 + $0x28] sm:$0xf] %v1089
        %1154 = vst [vmem:[%s177 + $0x2c] sm:$0xf] %v1090
        %1155 = vst [vmem:[%s177 + $0x30] sm:$0xf] %v1091
        %1156 = vst [vmem:[%s177 + $0x34] sm:$0xf] %v1092
        %1157 = vst [vmem:[%s177 + $0x38] sm:$0xf] %v1093
        %1158 = vst [vmem:[%s177 + $0x3c] sm:$0xf] %v1094
        %1159 = vst [vmem:[%s177 + $0x40] sm:$0xf] %v1095
        %1160 = vst [vmem:[%s177 + $0x44] sm:$0xf] %v1096
        %1161 = vst [vmem:[%s177 + $0x48] sm:$0xf] %v1097
        %1162 = vst [vmem:[%s177 + $0x4c] sm:$0xf] %v1098
        %1163 = vst [vmem:[%s177 + $0x50] sm:$0xf] %v1099
        %1164 = vst [vmem:[%s177 + $0x54] sm:$0xf] %v1100
        %1165 = vst [vmem:[%s177 + $0x58] sm:$0xf] %v1101
        %1166 = vst [vmem:[%s177 + $0x5c] sm:$0xf] %v1102
        %1167 = vst [vmem:[%s177 + $0x60] sm:$0xf] %v1103
        %1168 = vst [vmem:[%s177 + $0x64] sm:$0xf] %v1104
        %1169 = vst [vmem:[%s177 + $0x68] sm:$0xf] %v1105
        %1170 = vst [vmem:[%s177 + $0x6c] sm:$0xf] %v1106
        %1171 = vst [vmem:[%s177 + $0x70] sm:$0xf] %v1107
        %1172 = vst [vmem:[%s177 + $0x74] sm:$0xf] %v1108
        %1173 = vst [vmem:[%s177 + $0x78] sm:$0xf] %v1109
        %1174 = vst [vmem:[%s177 + $0x7c] sm:$0xf] %v1110
        %s1175 = sand.u32 %s75, 1
        %s1176 = scalar_lea.sflag [#allocation4], %s1175
        %s1177 = sand.u32 %s75, 1
        %s1178 = smul.addr %s1177, 128
        %s1179 = scalar_lea.vmem [#allocation7], %s1178
        // Predicated region
        $region37: #{tpu_custom_call.1} parent=27 // pred_check
          %p1180 = pneg %p85
        $region38: #{tpu_custom_call.1} parent=27 // pred_check_branch
          %1182 = sbr.rel (%p1180) target = $region40
        $region39: #{tpu_custom_call.1} parent=27 // pred_region
          %s1183 = smul.u32 32, %s20
          %s1185 = ssub.s32 2048, 2048
          %1186 = vsyncadd %s1176, %s1185
          %s1187 = smul.addr %s1183, 64
          %s1188 = scalar_lea.hbm %s2, %s1187
          %s1189 = sshll.u32 %s1179, 4
          %s1190 = int_to_ptr.vmem [resolvable:$true] %s1189
          %1195 = dma.vmem_to_hbm [thread:$0]  %s1190, 2048, %s1188, %s1176, 64, 64, 4
        $region40: #{tpu_custom_call.1} parent=27 // pred_fallthru
          _
      $region28: #{tpu_custom_call.1} parent=5 // pred_fallthru
        _
      %p1196 = scmp.le.s32.totalorder 2, %s15
      // Predicated region
      $region41: #{tpu_custom_call.1} parent=5 // pred_check
        %p1197 = pneg %p1196
      $region42: #{tpu_custom_call.1} parent=5 // pred_check_branch
        %1199 = sbr.rel (%p1197) target = $region44
      $region43: #{tpu_custom_call.1} parent=5 // pred_region
        %s1200 = ssub.s32 %s15, 2
        // Predicated region
        $region45: #{tpu_custom_call.1} parent=43 // pred_check
          %p1201 = pneg %p91
        $region46: #{tpu_custom_call.1} parent=43 // pred_check_branch
          %1203 = sbr.rel (%p1201) target = $region48
        $region47: #{tpu_custom_call.1} parent=43 // pred_region
          %s1204 = sand.u32 %s76, 1
          %s1205 = scalar_lea.sflag [#allocation4], %s1204
          %s1206 = sand.u32 %s76, 1
          %s1207 = smul.addr %s1206, 128
          %s1208 = scalar_lea.vmem [#allocation7], %s1207
          %1209 = dma.done %s1205, 2048
        $region48: #{tpu_custom_call.1} parent=43 // pred_fallthru
          _
      $region44: #{tpu_custom_call.1} parent=5 // pred_fallthru
        _
    $region6: #{tpu_custom_call.1} parent=1 // loop_footer
      %s19 = sadd.s32 1, %s15
    $region7: #{tpu_custom_call.1} parent=1 // loop_footer_branch
      %14 = sbr.rel target = $region3
    $region8: #{tpu_custom_call.1} parent=1 // loop_exit
      _
    %1210 = vsyncpa [#allocation3], 1
    %s1211 = scalar_lea.sflag [#allocation3], 1
    %1212 = vsyncpa %s1211, 1
    %1213 = vsyncpa [#allocation6], 1
    %1214 = vsyncpa [#allocation4], 1
    %s1215 = scalar_lea.sflag [#allocation4], 1
    %1216 = vsyncpa %s1215, 1

</llo_original>
